<compile_context>
chip_gen: v5e
topology: v5e:2x2
jax: 0.10.0
libtpu: 0.0.40
codegen_flags: <defaults>
</compile_context>

<pallas_src>
import jax
import jax.numpy as jnp
from jax.experimental import pallas as pl
from jax.experimental.pallas import tpu as pltpu


def nest_mlp_kernel(x_ref, w1_ref, b1_ref, w2_ref, b2_ref, w3_ref, b3_ref, o_ref):
    # x and weights arrive as bf16; MXU consumes bf16 natively and accumulates
    # in f32 (preferred_element_type).  Bias adds / ReLU run on f32 (VPU-safe
    # on v5e which has no bf16 VPU).
    h1 = jnp.dot(x_ref[...], w1_ref[...], preferred_element_type=jnp.float32)
    h1 = jnp.maximum(h1 + b1_ref[...], 0.0)

    h2 = jnp.dot(h1.astype(jnp.bfloat16), w2_ref[...],
                 preferred_element_type=jnp.float32)
    h2 = jnp.maximum(h2 + b2_ref[...], 0.0)

    y = jnp.dot(h2.astype(jnp.bfloat16), w3_ref[...],
                preferred_element_type=jnp.float32)
    o_ref[...] = (y + b3_ref[...]).astype(o_ref.dtype)


def _round_up(n, m):
    return ((n + m - 1) // m) * m


def nest_mlp(x, params, *, tile_b=8192):
    """x: (B, 20) float32 -> (B, 16) float32."""
    w1, b1, w2, b2, w3, b3 = params
    B, d_in = x.shape
    d_out = w3.shape[1]

    # Batch tile: multiple of 8 sublanes, clamped for small inputs.  At the
    # default 8192 rows the f32/bf16 working set (x + h1/h2/y + out, incl.
    # double buffers) is ~5-6 MB -> fits default scoped VMEM on v5e/v6e/v7x.
    tile_b = max(8, min(tile_b, _round_up(B, 8)))
    b_pad = _round_up(B, tile_b)

    # bf16 inputs/weights halve HBM traffic for the dominant x stream.
    xb = x.astype(jnp.bfloat16)
    if b_pad != B:
        xb = jnp.pad(xb, ((0, b_pad - B), (0, 0)))
    w1b = w1.astype(jnp.bfloat16)
    w2b = w2.astype(jnp.bfloat16)
    w3b = w3.astype(jnp.bfloat16)

    grid = (b_pad // tile_b,)
    resident = lambda i: (0, 0)  # weights/biases: same block every step

    flops = 2 * b_pad * (20 * 64 + 64 * 32 + 32 * 16)
    bytes_accessed = int(
        xb.size * 2                      # bf16 activations in
        + b_pad * d_out * 4              # f32 output
        + (w1b.size + w2b.size + w3b.size) * 2
        + (b1.size + b2.size + b3.size) * 4
    )

    out = pl.pallas_call(
        nest_mlp_kernel,
        out_shape=jax.ShapeDtypeStruct((b_pad, d_out), jnp.float32),
        grid=grid,
        in_specs=[
            pl.BlockSpec((tile_b, d_in), lambda i: (i, 0)),   # x: tiled over batch
            pl.BlockSpec(w1.shape, resident),
            pl.BlockSpec(b1.shape, resident),
            pl.BlockSpec(w2.shape, resident),
            pl.BlockSpec(b2.shape, resident),
            pl.BlockSpec(w3.shape, resident),
            pl.BlockSpec(b3.shape, resident),
        ],
        out_specs=pl.BlockSpec((tile_b, d_out), lambda i: (i, 0)),
        compiler_params=pltpu.CompilerParams(
            dimension_semantics=("parallel",),   # megacore split on v7x
            vmem_limit_bytes=32 * 1024 * 1024,
        ),
        cost_estimate=pl.CostEstimate(
            flops=flops, transcendentals=0, bytes_accessed=bytes_accessed),
    )(xb, w1b, b1, w2b, b2, w3b, b3)

    return out[:B]


def init_params(key):
    """nn.Linear-style init (uniform +-1/sqrt(fan_in)).

    Weights stored as (in_features, out_features) == PyTorch W.T;
    biases stored as (1, out_features) for lane broadcasting.
    """
    dims = [(20, 64), (64, 32), (32, 16)]
    params = []
    for fan_in, fan_out in dims:
        key, kw, kb = jax.random.split(key, 3)
        bound = 1.0 / jnp.sqrt(fan_in)
        w = jax.random.uniform(kw, (fan_in, fan_out), jnp.float32, -bound, bound)
        b = jax.random.uniform(kb, (1, fan_out), jnp.float32, -bound, bound)
        params += [w, b]
    return tuple(params)


def nest_mlp_ref(x, params):
    w1, b1, w2, b2, w3, b3 = params
    h1 = jnp.maximum(x @ w1 + b1, 0.0)
    h2 = jnp.maximum(h1 @ w2 + b2, 0.0)
    return h2 @ w3 + b3


if __name__ == "__main__":
    key = jax.random.PRNGKey(0)
    key, kx = jax.random.split(key)
    params = init_params(key)

    # Matches `X = torch.rand(2, 20)` from the reference module.
    x = jax.random.uniform(kx, (2, 20), jnp.float32)
    out = jax.block_until_ready(nest_mlp(x, params))
    ref = nest_mlp_ref(x, params)
    assert out.shape == (2, 16), out.shape
    # bf16 inputs/weights vs pure-f32 reference -> mixed-precision tolerance.
    assert jnp.allclose(out, ref, atol=2e-2, rtol=2e-2), "mismatch vs JAX reference"

    # Exercise the gridded / padded path (batch not divisible by the tile).
    key, kx2 = jax.random.split(key)
    x2 = jax.random.uniform(kx2, (1000, 20), jnp.float32)
    out2 = jax.block_until_ready(nest_mlp(x2, params, tile_b=256))
    ref2 = nest_mlp_ref(x2, params)
    assert out2.shape == (1000, 16), out2.shape
    assert jnp.allclose(out2, ref2, atol=2e-2, rtol=2e-2), "mismatch on tiled batch"

    print("KERNEL_OK")
</pallas_src>

<mosaic_0001>
module attributes {stable_mosaic.version = 11 : i64} {
  func.func @nest_mlp_kernel(%arg0: i32, %arg1: memref<8x20xbf16, #tpu.memory_space<vmem>>, %arg2: memref<20x64xbf16, #tpu.memory_space<vmem>>, %arg3: memref<1x64xf32, #tpu.memory_space<vmem>>, %arg4: memref<64x32xbf16, #tpu.memory_space<vmem>>, %arg5: memref<1x32xf32, #tpu.memory_space<vmem>>, %arg6: memref<32x16xbf16, #tpu.memory_space<vmem>>, %arg7: memref<1x16xf32, #tpu.memory_space<vmem>>, %arg8: memref<8x16xf32, #tpu.memory_space<vmem>>) attributes {dimension_semantics = [#tpu.dimension_semantics<parallel>], iteration_bounds = array<i64: 1>, scalar_prefetch = 0 : i64, scratch_operands = 0 : i64, tpu.core_type = #tpu.core_type<tc>, window_params = [{transform_indices = @transform_0, window_bounds = array<i64: 8, 20>}, {pipeline_mode = #tpu.pipeline_mode<synchronous>, transform_indices = @transform_1, window_bounds = array<i64: 20, 64>}, {pipeline_mode = #tpu.pipeline_mode<synchronous>, transform_indices = @transform_2, window_bounds = array<i64: 1, 64>}, {pipeline_mode = #tpu.pipeline_mode<synchronous>, transform_indices = @transform_3, window_bounds = array<i64: 64, 32>}, {pipeline_mode = #tpu.pipeline_mode<synchronous>, transform_indices = @transform_4, window_bounds = array<i64: 1, 32>}, {pipeline_mode = #tpu.pipeline_mode<synchronous>, transform_indices = @transform_5, window_bounds = array<i64: 32, 16>}, {pipeline_mode = #tpu.pipeline_mode<synchronous>, transform_indices = @transform_6, window_bounds = array<i64: 1, 16>}, {transform_indices = @transform_7, window_bounds = array<i64: 8, 16>}]} {
    %c0 = arith.constant 0 : index
    %c0_0 = arith.constant 0 : index
    %0 = vector.load %arg1[%c0, %c0_0] : memref<8x20xbf16, #tpu.memory_space<vmem>>, vector<8x20xbf16>
    %c0_1 = arith.constant 0 : index
    %c0_2 = arith.constant 0 : index
    %1 = vector.load %arg2[%c0_1, %c0_2] : memref<20x64xbf16, #tpu.memory_space<vmem>>, vector<20x64xbf16>
    %cst = arith.constant dense<0.000000e+00> : vector<8x64xf32>
    %2 = tpu.matmul %0, %1, %cst {dimension_numbers = #tpu.dot_dimension_numbers<[1], [0], [0], [1], [0, 0, 1, 1], [], []>} : vector<8x20xbf16>, vector<20x64xbf16>, vector<8x64xf32> -> vector<8x64xf32>
    %c0_3 = arith.constant 0 : index
    %c0_4 = arith.constant 0 : index
    %3 = vector.load %arg3[%c0_3, %c0_4] : memref<1x64xf32, #tpu.memory_space<vmem>>, vector<1x64xf32>
    %4 = vector.broadcast %3 : vector<1x64xf32> to vector<8x64xf32>
    %5 = arith.addf %2, %4 : vector<8x64xf32>
    %cst_5 = arith.constant 0.000000e+00 : f32
    %6 = vector.broadcast %cst_5 : f32 to vector<8x64xf32>
    %7 = arith.maximumf %5, %6 : vector<8x64xf32>
    %8 = arith.truncf %7 : vector<8x64xf32> to vector<8x64xbf16>
    %c0_6 = arith.constant 0 : index
    %c0_7 = arith.constant 0 : index
    %9 = vector.load %arg4[%c0_6, %c0_7] : memref<64x32xbf16, #tpu.memory_space<vmem>>, vector<64x32xbf16>
    %cst_8 = arith.constant dense<0.000000e+00> : vector<8x32xf32>
    %10 = tpu.matmul %8, %9, %cst_8 {dimension_numbers = #tpu.dot_dimension_numbers<[1], [0], [0], [1], [0, 0, 1, 1], [], []>} : vector<8x64xbf16>, vector<64x32xbf16>, vector<8x32xf32> -> vector<8x32xf32>
    %c0_9 = arith.constant 0 : index
    %c0_10 = arith.constant 0 : index
    %11 = vector.load %arg5[%c0_9, %c0_10] : memref<1x32xf32, #tpu.memory_space<vmem>>, vector<1x32xf32>
    %12 = vector.broadcast %11 : vector<1x32xf32> to vector<8x32xf32>
    %13 = arith.addf %10, %12 : vector<8x32xf32>
    %cst_11 = arith.constant 0.000000e+00 : f32
    %14 = vector.broadcast %cst_11 : f32 to vector<8x32xf32>
    %15 = arith.maximumf %13, %14 : vector<8x32xf32>
    %16 = arith.truncf %15 : vector<8x32xf32> to vector<8x32xbf16>
    %c0_12 = arith.constant 0 : index
    %c0_13 = arith.constant 0 : index
    %17 = vector.load %arg6[%c0_12, %c0_13] : memref<32x16xbf16, #tpu.memory_space<vmem>>, vector<32x16xbf16>
    %cst_14 = arith.constant dense<0.000000e+00> : vector<8x16xf32>
    %18 = tpu.matmul %16, %17, %cst_14 {dimension_numbers = #tpu.dot_dimension_numbers<[1], [0], [0], [1], [0, 0, 1, 1], [], []>} : vector<8x32xbf16>, vector<32x16xbf16>, vector<8x16xf32> -> vector<8x16xf32>
    %c0_15 = arith.constant 0 : index
    %c0_16 = arith.constant 0 : index
    %19 = vector.load %arg7[%c0_15, %c0_16] : memref<1x16xf32, #tpu.memory_space<vmem>>, vector<1x16xf32>
    %20 = vector.broadcast %19 : vector<1x16xf32> to vector<8x16xf32>
    %21 = arith.addf %18, %20 : vector<8x16xf32>
    %c0_17 = arith.constant 0 : index
    %c0_18 = arith.constant 0 : index
    %22 = vector.load %arg8[%c0_17, %c0_18] : memref<8x16xf32, #tpu.memory_space<vmem>>, vector<8x16xf32>
    tpu.vector_store %arg8[%c0_17, %c0_18], %21 {strides = array<i32>} : memref<8x16xf32, #tpu.memory_space<vmem>>, vector<8x16xf32>,
    return
  }
  func.func @transform_0(%arg0: i32) -> (i32, i32) {
    %c0_i32 = arith.constant 0 : i32
    %c0_i32_0 = arith.constant 0 : i32
    return %arg0, %c0_i32 : i32, i32
  }
  func.func @transform_1(%arg0: i32) -> (i32, i32) {
    %c0_i32 = arith.constant 0 : i32
    %c0_i32_0 = arith.constant 0 : i32
    %c0_i32_1 = arith.constant 0 : i32
    return %c0_i32, %c0_i32_0 : i32, i32
  }
  func.func @transform_2(%arg0: i32) -> (i32, i32) {
    %c0_i32 = arith.constant 0 : i32
    %c0_i32_0 = arith.constant 0 : i32
    %c0_i32_1 = arith.constant 0 : i32
    return %c0_i32, %c0_i32_0 : i32, i32
  }
  func.func @transform_3(%arg0: i32) -> (i32, i32) {
    %c0_i32 = arith.constant 0 : i32
    %c0_i32_0 = arith.constant 0 : i32
    %c0_i32_1 = arith.constant 0 : i32
    return %c0_i32, %c0_i32_0 : i32, i32
  }
  func.func @transform_4(%arg0: i32) -> (i32, i32) {
    %c0_i32 = arith.constant 0 : i32
    %c0_i32_0 = arith.constant 0 : i32
    %c0_i32_1 = arith.constant 0 : i32
    return %c0_i32, %c0_i32_0 : i32, i32
  }
  func.func @transform_5(%arg0: i32) -> (i32, i32) {
    %c0_i32 = arith.constant 0 : i32
    %c0_i32_0 = arith.constant 0 : i32
    %c0_i32_1 = arith.constant 0 : i32
    return %c0_i32, %c0_i32_0 : i32, i32
  }
  func.func @transform_6(%arg0: i32) -> (i32, i32) {
    %c0_i32 = arith.constant 0 : i32
    %c0_i32_0 = arith.constant 0 : i32
    %c0_i32_1 = arith.constant 0 : i32
    return %c0_i32, %c0_i32_0 : i32, i32
  }
  func.func @transform_7(%arg0: i32) -> (i32, i32) {
    %c0_i32 = arith.constant 0 : i32
    %c0_i32_0 = arith.constant 0 : i32
    return %arg0, %c0_i32 : i32, i32
  }
}

</mosaic_0001>

<llo_original>
// kernel: tpu_custom_call.1
$region0: #{tpu_custom_call.1}
  #allocation0 [shape = 'u32[]', space=smem, size = 0x4, offset = 0x4, fixed_abs, tag = 'smem constant byte address 0x4 - core index']
  #allocation1 [shape = 'u32[72,128]{1,0:T(1,128)}', space=vmem, size = 0x9000, scoped, tag = 'internal scratch']
  %s0 = inlined_call_operand.vmem [shape: bf16[8,20], index: 0, kind: input, shape index: {}]
  %s1 = inlined_call_operand.vmem [shape: bf16[20,64], index: 1, kind: input, shape index: {}]
  %s2 = inlined_call_operand.vmem [shape: f32[1,64], index: 2, kind: input, shape index: {}]
  %s3 = inlined_call_operand.vmem [shape: bf16[64,32], index: 3, kind: input, shape index: {}]
  %s4 = inlined_call_operand.vmem [shape: f32[1,32], index: 4, kind: input, shape index: {}]
  %s5 = inlined_call_operand.vmem [shape: bf16[32,16], index: 5, kind: input, shape index: {}]
  %s6 = inlined_call_operand.vmem [shape: f32[1,16], index: 6, kind: input, shape index: {}]
  %s7 = inlined_call_operand.hbm [shape: f32[8,16], index: 7, kind: output, shape index: {}]
  %s8 = sld [smem:[#allocation0]]
  $region38: #{tpu_custom_call.1} parent=0
    _
  %s10 = ssub.s32 1, %s8
  %s11 = scalar_select 0, %s10, %s8
  $region1: #{tpu_custom_call.1} parent=0
    #allocation2 [shape = 'u8[4096]{0}', space=vmem, size = 0x1000, scoped, tag = 'output window, operand 0, single buffered']
    #allocation3 [shape = 's32[1]{0}', space=sflag, size = 0x4, scoped, tag = 'scoped memory for tpu_custom_call.1']
    %12 = vsyncpa [#allocation3], 0
    // Predicated region
    $region2: #{tpu_custom_call.1} parent=1 // pred_check
      _
    $region3: #{tpu_custom_call.1} parent=1 // pred_check_branch
      %14 = sbr.rel (0) target = $region5
    $region4: #{tpu_custom_call.1} parent=1 // pred_region
      _
    $region5: #{tpu_custom_call.1} parent=1 // pred_fallthru
      _
    // Predicated region
    $region6: #{tpu_custom_call.1} parent=1 // pred_check
      _
    $region7: #{tpu_custom_call.1} parent=1 // pred_check_branch
      %16 = sbr.rel (0) target = $region9
    $region8: #{tpu_custom_call.1} parent=1 // pred_region
      _
    $region9: #{tpu_custom_call.1} parent=1 // pred_fallthru
      _
    // Predicated region
    $region10: #{tpu_custom_call.1} parent=1 // pred_check
      _
    $region11: #{tpu_custom_call.1} parent=1 // pred_check_branch
      %18 = sbr.rel (0) target = $region13
    $region12: #{tpu_custom_call.1} parent=1 // pred_region
      _
    $region13: #{tpu_custom_call.1} parent=1 // pred_fallthru
      _
    // Predicated region
    $region14: #{tpu_custom_call.1} parent=1 // pred_check
      _
    $region15: #{tpu_custom_call.1} parent=1 // pred_check_branch
      %20 = sbr.rel (0) target = $region17
    $region16: #{tpu_custom_call.1} parent=1 // pred_region
      _
    $region17: #{tpu_custom_call.1} parent=1 // pred_fallthru
      _
    // Predicated region
    $region18: #{tpu_custom_call.1} parent=1 // pred_check
      _
    $region19: #{tpu_custom_call.1} parent=1 // pred_check_branch
      %22 = sbr.rel (0) target = $region21
    $region20: #{tpu_custom_call.1} parent=1 // pred_region
      _
    $region21: #{tpu_custom_call.1} parent=1 // pred_fallthru
      _
    // Predicated region
    $region22: #{tpu_custom_call.1} parent=1 // pred_check
      _
    $region23: #{tpu_custom_call.1} parent=1 // pred_check_branch
      %24 = sbr.rel (0) target = $region25
    $region24: #{tpu_custom_call.1} parent=1 // pred_region
      _
    $region25: #{tpu_custom_call.1} parent=1 // pred_fallthru
      _
    // Predicated region
    $region26: #{tpu_custom_call.1} parent=1 // pred_check
      _
    $region27: #{tpu_custom_call.1} parent=1 // pred_check_branch
      %26 = sbr.rel (0) target = $region29
    $region28: #{tpu_custom_call.1} parent=1 // pred_region
      _
    $region29: #{tpu_custom_call.1} parent=1 // pred_fallthru
      _
    %v28 = vld [vmem:[%s0] sm:$0xf]
    %v29 = vld [vmem:[%s1] sm:$0xf]
    %v30 = vld [vmem:[%s1 + $0x4] sm:$0xf]
    %v31 = vld [vmem:[%s1 + $0x8] sm:$0x3]
    %v32 = vld [vmem:[%s2] sm:$0x1]
    %v34 = vperm.slane %v32, 0
    %v39 = vunpack.c.l.b16 %v29
    %v40 = vunpack.c.l.b16 %v30
    %v41 = vunpack.c.l.b16 %v31
    %v42 = vpack.c.b16 %v40, %v39
    %v43 = vpack.c.b16 %v41, %v41
    %vm45 = vcmask 162816
    %v47 = vsel %vm45, %v28, 0
    %vm49 = vcmask 1041408
    %v51 = vsel %vm49, %v43, 0
    %53 = vmatpush.bf16.msra.mxu0 0
    %54 = vmatpush.bf16.msra.mxu0 0
    %55 = vmatpush.bf16.msra.mxu0 0
    %56 = vmatpush.bf16.msra.mxu0 0
    %57 = vmatpush.bf16.msra.mxu0 0
    %58 = vmatpush.bf16.msra.mxu0 0
    %59 = vmatpush.bf16.msra.mxu0 %v51
    %60 = vmatpush.bf16.msra.mxu0 %v42
    %61 = vmatmul.bf16.gmra.mxu0 %v47
    %v62 = vpop.f32.mrf.mxu0
    %v63 = vadd.f32 %v34, %v62
    %v64 = vpop.f32.mrf.mxu0
    %65 = vdwg.mxu0
    %v66 = vmax.f32 %v63, 0.0
    %v67 = vpack.c.bf16 %v66, %v66
    %v68 = vld [vmem:[%s3] sm:$0xf]
    %v69 = vld [vmem:[%s3 + $0x4] sm:$0xf]
    %v70 = vld [vmem:[%s3 + $0x8] sm:$0xf]
    %v71 = vld [vmem:[%s3 + $0xc] sm:$0xf]
    %v72 = vld [vmem:[%s3 + $0x10] sm:$0xf]
    %v73 = vld [vmem:[%s3 + $0x14] sm:$0xf]
    %v74 = vld [vmem:[%s3 + $0x18] sm:$0xf]
    %v75 = vld [vmem:[%s3 + $0x1c] sm:$0xf]
    %v76 = vld [vmem:[%s4] sm:$0x1]
    %v78 = vperm.slane %v76, 0
    %v88 = vunpack.c.l.b16 %v68
    %v89 = vunpack.c.l.b16 %v69
    %v90 = vunpack.c.l.b16 %v70
    %v91 = vunpack.c.l.b16 %v71
    %v92 = vunpack.c.l.b16 %v72
    %v93 = vunpack.c.l.b16 %v73
    %v94 = vunpack.c.l.b16 %v74
    %v95 = vunpack.c.l.b16 %v75
    %v96 = vpack.c.b16 %v89, %v88
    %v97 = vpack.c.b16 %v91, %v90
    %v98 = vpack.c.b16 %v93, %v92
    %v99 = vpack.c.b16 %v95, %v94
    %vm104 = vcmask 523264
    %v106 = vsel %vm104, %v67, 0
    %108 = vmatpush.bf16.msra.mxu0 0
    %109 = vmatpush.bf16.msra.mxu0 0
    %110 = vmatpush.bf16.msra.mxu0 0
    %111 = vmatpush.bf16.msra.mxu0 0
    %112 = vmatpush.bf16.msra.mxu0 %v99
    %113 = vmatpush.bf16.msra.mxu0 %v98
    %114 = vmatpush.bf16.msra.mxu0 %v97
    %115 = vmatpush.bf16.msra.mxu0 %v96
    %116 = vmatmul.bf16.gmra.mxu0 %v106
    %v117 = vpop.f32.mrf.mxu0
    %v118 = vadd.f32 %v78, %v117
    %v119 = vpop.f32.mrf.mxu0
    %120 = vdwg.mxu0
    %v121 = vmax.f32 %v118, 0.0
    %v122 = vpack.c.bf16 %v121, %v121
    %v123 = vld [vmem:[%s5] sm:$0xf]
    %v124 = vld [vmem:[%s5 + $0x4] sm:$0xf]
    %v125 = vld [vmem:[%s5 + $0x8] sm:$0xf]
    %v126 = vld [vmem:[%s5 + $0xc] sm:$0xf]
    %v127 = vld [vmem:[%s6] sm:$0x1]
    %v129 = vperm.slane %v127, 0
    %v135 = vunpack.c.l.b16 %v123
    %v136 = vunpack.c.l.b16 %v124
    %v137 = vunpack.c.l.b16 %v125
    %v138 = vunpack.c.l.b16 %v126
    %v139 = vpack.c.b16 %v136, %v135
    %v140 = vpack.c.b16 %v138, %v137
    %vm143 = vcmask 261120
    %v145 = vsel %vm143, %v122, 0
    %147 = vmatpush.bf16.msra.mxu0 0
    %148 = vmatpush.bf16.msra.mxu0 0
    %149 = vmatpush.bf16.msra.mxu0 0
    %150 = vmatpush.bf16.msra.mxu0 0
    %151 = vmatpush.bf16.msra.mxu0 0
    %152 = vmatpush.bf16.msra.mxu0 0
    %153 = vmatpush.bf16.msra.mxu0 %v140
    %154 = vmatpush.bf16.msra.mxu0 %v139
    %155 = vmatmul.bf16.gmra.mxu0 %v145
    %v156 = vpop.f32.mrf.mxu0
    %v157 = vadd.f32 %v129, %v156
    %v158 = vpop.f32.mrf.mxu0
    %159 = vdwg.mxu0
    %vm160 = vcmask 130048
    %161 = vst.msk [vmem:[#allocation2] sm:$0xff] %vm160, %v157
    // Predicated region
    $region30: #{tpu_custom_call.1} parent=1 // pred_check
      _
    $region31: #{tpu_custom_call.1} parent=1 // pred_check_branch
      %163 = sbr.rel (0) target = $region33
    $region32: #{tpu_custom_call.1} parent=1 // pred_region
      %165 = vsyncadd [#allocation3], 0
      %s167 = sshll.u32 [#allocation2], 4
      %s168 = int_to_ptr.vmem [resolvable:$true] %s167
      %s169 = sshll.u32 %s7, 4
      %s170 = int_to_ptr.hbm [resolvable:$true] %s169
      %172 = dma.vmem_to_hbm [thread:$0]  %s168, 128, %s170, [#allocation3]
    $region33: #{tpu_custom_call.1} parent=1 // pred_fallthru
      _
    // Predicated region
    $region34: #{tpu_custom_call.1} parent=1 // pred_check
      _
    $region35: #{tpu_custom_call.1} parent=1 // pred_check_branch
      %174 = sbr.rel (0) target = $region37
    $region36: #{tpu_custom_call.1} parent=1 // pred_region
      %176 = dma.done [#allocation3], 128
    $region37: #{tpu_custom_call.1} parent=1 // pred_fallthru
      _
    %177 = vsyncpa [#allocation3], 1

</llo_original>
